<compile_context>
chip_gen: v7x
topology: tpu7x:2x2x1
jax: 0.10.0
libtpu: 0.0.40
codegen_flags: <defaults>
</compile_context>

<pallas_src>
import functools

import jax
import jax.numpy as jnp
from jax import lax
from jax.experimental import pallas as pl
from jax.experimental.pallas import tpu as pltpu


# Contract K of x:(tm, tk) with K of w:(tn, tk)  ->  (tm, tn)
_NT_DIMS = (((1,), (1,)), ((), ()))


def _w8a32_kernel_bias(x_ref, w_ref, s_ref, b_ref, o_ref, acc_ref):
    # x_ref : (tm, tk) f32   w_ref : (tn, tk) int8
    # s_ref : (1, tn)  f32   b_ref : (1, tn)  f32
    # o_ref : (tm, tn) f32   acc_ref: (tm, tn) f32 scratch
    @pl.when(pl.program_id(2) == 0)
    def _init():
        acc_ref[...] = jnp.zeros_like(acc_ref)

    w = w_ref[...].astype(jnp.float32)  # per-tile exact dequant (zero_point == 0)
    acc_ref[...] += lax.dot_general(
        x_ref[...], w, _NT_DIMS, preferred_element_type=jnp.float32
    )

    @pl.when(pl.program_id(2) == pl.num_programs(2) - 1)
    def _epilogue():
        o_ref[...] = acc_ref[...] * s_ref[...] + b_ref[...]


def _w8a32_kernel_nobias(x_ref, w_ref, s_ref, o_ref, acc_ref):
    @pl.when(pl.program_id(2) == 0)
    def _init():
        acc_ref[...] = jnp.zeros_like(acc_ref)

    w = w_ref[...].astype(jnp.float32)
    acc_ref[...] += lax.dot_general(
        x_ref[...], w, _NT_DIMS, preferred_element_type=jnp.float32
    )

    @pl.when(pl.program_id(2) == pl.num_programs(2) - 1)
    def _epilogue():
        o_ref[...] = acc_ref[...] * s_ref[...]


def _round_up(x, m):
    return ((x + m - 1) // m) * m


@functools.partial(jax.jit, static_argnames=("tm", "tn", "tk", "has_bias"))
def _w8a32_call(x, q_w, s_w, bias, *, tm, tn, tk, has_bias):
    B, K = x.shape
    N, K2 = q_w.shape
    assert K == K2, f"in_features mismatch: {K} vs {K2}"

    # Effective tile sizes: aligned, never larger than the (padded) problem.
    tm_e = min(tm, _round_up(B, 8))      # f32 sublane multiple
    tn_e = min(tn, _round_up(N, 128))    # lane-dense output, int8 sublane mult of 32
    tk_e = min(tk, _round_up(K, 128))    # lane multiple for both operands
    Bp = _round_up(B, tm_e)
    Np = _round_up(N, tn_e)
    Kp = _round_up(K, tk_e)

    xp = x if (Bp == B and Kp == K) else jnp.pad(x, ((0, Bp - B), (0, Kp - K)))
    wp = q_w if (Np == N and Kp == K) else jnp.pad(q_w, ((0, Np - N), (0, Kp - K)))
    sp = s_w.astype(jnp.float32).reshape(1, N)
    if Np != N:
        sp = jnp.pad(sp, ((0, 0), (0, Np - N)))

    args = [xp, wp, sp]
    in_specs = [
        pl.BlockSpec((tm_e, tk_e), lambda i, j, k: (i, k)),   # activations
        pl.BlockSpec((tn_e, tk_e), lambda i, j, k: (j, k)),   # int8 weight (native N,K)
        pl.BlockSpec((1, tn_e), lambda i, j, k: (0, j)),      # scales (epilogue only)
    ]
    if has_bias:
        bp = bias.astype(jnp.float32).reshape(1, N)
        if Np != N:
            bp = jnp.pad(bp, ((0, 0), (0, Np - N)))
        args.append(bp)
        in_specs.append(pl.BlockSpec((1, tn_e), lambda i, j, k: (0, j)))

    grid = (Bp // tm_e, Np // tn_e, Kp // tk_e)
    kernel = _w8a32_kernel_bias if has_bias else _w8a32_kernel_nobias

    out = pl.pallas_call(
        kernel,
        out_shape=jax.ShapeDtypeStruct((Bp, Np), jnp.float32),
        grid_spec=pltpu.PrefetchScalarGridSpec(
            num_scalar_prefetch=0,
            grid=grid,
            in_specs=in_specs,
            out_specs=pl.BlockSpec((tm_e, tn_e), lambda i, j, k: (i, j)),
            scratch_shapes=[pltpu.VMEM((tm_e, tn_e), jnp.float32)],
        ),
        compiler_params=pltpu.CompilerParams(
            dimension_semantics=("parallel", "parallel", "arbitrary"),
            vmem_limit_bytes=32 * 1024 * 1024,
        ),
        cost_estimate=pl.CostEstimate(
            flops=2 * B * N * K,
            bytes_accessed=B * K * 4 + N * K * 1 + B * N * 4
            + (2 if has_bias else 1) * N * 4,
            transcendentals=0,
        ),
    )(*args)

    if Bp != B or Np != N:
        out = out[:B, :N]
    return out


def w8_a32_forward(x, q_w, s_w, bias=None, *, tm=256, tn=256, tk=512):
    """
    x    : (B, in_features)             float32
    q_w  : (out_features, in_features)  int8  (native layout, never transposed on host)
    s_w  : (out_features,)              float32
    bias : (1, out_features)            float32 or None
    returns (B, out_features) float32
    """
    return _w8a32_call(
        x.astype(jnp.float32), q_w, s_w,
        bias if bias is not None else jnp.zeros((1, q_w.shape[0]), jnp.float32),
        tm=tm, tn=tn, tk=tk, has_bias=bias is not None,
    )


class W8A32LinearLayer:
    """JAX/Pallas mirror of the PyTorch W8A32LinearLayer buffers + forward."""

    def __init__(self, in_features, out_features, bias=True, key=None):
        if key is None:
            key = jax.random.PRNGKey(0)
        k_w, k_s, k_b = jax.random.split(key, 3)
        self.in_features = in_features
        self.out_features = out_features
        # torch.randint(low=-128, high=127, ...) -> int8 in [-128, 126]
        self.int8_weights = jax.random.randint(
            k_w, (out_features, in_features), minval=-128, maxval=127, dtype=jnp.int32
        ).astype(jnp.int8)
        self.scales = jax.random.normal(k_s, (out_features,), dtype=jnp.float32)
        self.zero_points = jnp.zeros((out_features,), dtype=jnp.float32)
        if bias:
            self.bias = jax.random.normal(k_b, (1, out_features), dtype=jnp.float32)
        else:
            self.bias = None
        # TODO(synk): quantize() not translated -- it depends on
        # linear_q_symmetric_per_channel, which is not part of the provided spec.

    def __call__(self, x):
        return w8_a32_forward(x, self.int8_weights, self.scales, self.bias)


def _reference(x, q_w, s_w, bias):
    out = x @ q_w.T.astype(jnp.float32) * s_w[None, :]
    if bias is not None:
        out = out + bias
    return out


if __name__ == "__main__":
    key = jax.random.PRNGKey(0)
    k_layer, k_x, k_x2, k_layer2 = jax.random.split(key, 4)

    # Test 1: small shapes matching the original toy example (single-tile path).
    batch, in_features, out_features = 8, 32, 64
    layer = W8A32LinearLayer(in_features, out_features, bias=True, key=k_layer)
    x = jax.random.normal(k_x, (batch, in_features), dtype=jnp.float32)
    out = jax.block_until_ready(layer(x))
    ref = _reference(x, layer.int8_weights, layer.scales, layer.bias)
    assert out.shape == (batch, out_features)
    assert jnp.allclose(out, ref, atol=1e-4, rtol=1e-4)

    # Test 2: multi-tile path (multiple B/N/K grid steps, accumulator + epilogue,
    # no-bias kernel).  Small enough to stay cheap.
    batch2, in2, out2 = 16, 384, 256
    layer2 = W8A32LinearLayer(in2, out2, bias=False, key=k_layer2)
    x2 = jax.random.normal(k_x2, (batch2, in2), dtype=jnp.float32)
    out2_v = jax.block_until_ready(
        w8_a32_forward(x2, layer2.int8_weights, layer2.scales, None,
                       tm=8, tn=128, tk=128)
    )
    ref2 = _reference(x2, layer2.int8_weights, layer2.scales, None)
    assert out2_v.shape == (batch2, out2)
    assert jnp.allclose(out2_v, ref2, atol=1e-3, rtol=1e-4)

    print("KERNEL_OK")
</pallas_src>

<mosaic_0001>
module attributes {stable_mosaic.version = 11 : i64} {
  func.func @_w8a32_kernel_bias(%arg0: i32, %arg1: i32, %arg2: i32, %arg3: memref<8x128xf32, #tpu.memory_space<vmem>>, %arg4: memref<128x128xi8, #tpu.memory_space<vmem>>, %arg5: memref<1x128xf32, #tpu.memory_space<vmem>>, %arg6: memref<1x128xf32, #tpu.memory_space<vmem>>, %arg7: memref<8x128xf32, #tpu.memory_space<vmem>>, %arg8: memref<8x128xf32, #tpu.memory_space<vmem>>) attributes {dimension_semantics = [#tpu.dimension_semantics<parallel>, #tpu.dimension_semantics<parallel>, #tpu.dimension_semantics<arbitrary>], iteration_bounds = array<i64: 1, 1, 1>, scalar_prefetch = 0 : i64, scratch_operands = 1 : i64, tpu.core_type = #tpu.core_type<tc>, window_params = [{transform_indices = @transform_0, window_bounds = array<i64: 8, 128>}, {transform_indices = @transform_1, window_bounds = array<i64: 128, 128>}, {transform_indices = @transform_2, window_bounds = array<i64: 1, 128>}, {transform_indices = @transform_3, window_bounds = array<i64: 1, 128>}, {transform_indices = @transform_4, window_bounds = array<i64: 8, 128>}]} {
    %c0_i32 = arith.constant 0 : i32
    %0 = arith.cmpi eq, %arg2, %c0_i32 : i32
    %1 = arith.extui %0 : i1 to i32
    %c0_i32_0 = arith.constant 0 : i32
    %2 = arith.cmpi ne, %1, %c0_i32_0 : i32
    scf.if %2 {
      %cst_10 = arith.constant 0.000000e+00 : f32
      %13 = vector.broadcast %cst_10 : f32 to vector<8x128xf32>
      %c0_11 = arith.constant 0 : index
      %c0_12 = arith.constant 0 : index
      %14 = vector.load %arg8[%c0_11, %c0_12] : memref<8x128xf32, #tpu.memory_space<vmem>>, vector<8x128xf32>
      tpu.vector_store %arg8[%c0_11, %c0_12], %13 {strides = array<i32>} : memref<8x128xf32, #tpu.memory_space<vmem>>, vector<8x128xf32>,
    } else {
    }
    %c0 = arith.constant 0 : index
    %c0_1 = arith.constant 0 : index
    %3 = vector.load %arg4[%c0, %c0_1] : memref<128x128xi8, #tpu.memory_space<vmem>>, vector<128x128xi8>
    %4 = arith.sitofp %3 : vector<128x128xi8> to vector<128x128xf32>
    %c0_2 = arith.constant 0 : index
    %c0_3 = arith.constant 0 : index
    %5 = vector.load %arg8[%c0_2, %c0_3] : memref<8x128xf32, #tpu.memory_space<vmem>>, vector<8x128xf32>
    %c0_4 = arith.constant 0 : index
    %c0_5 = arith.constant 0 : index
    %6 = vector.load %arg3[%c0_4, %c0_5] : memref<8x128xf32, #tpu.memory_space<vmem>>, vector<8x128xf32>
    %cst = arith.constant dense<0.000000e+00> : vector<8x128xf32>
    %7 = tpu.matmul %6, %4, %cst {dimension_numbers = #tpu.dot_dimension_numbers<[1], [1], [0], [0], [0, 0, 1, 0], [], []>} : vector<8x128xf32>, vector<128x128xf32>, vector<8x128xf32> -> vector<8x128xf32>
    %8 = arith.addf %5, %7 : vector<8x128xf32>
    %c0_6 = arith.constant 0 : index
    %c0_7 = arith.constant 0 : index
    %9 = vector.load %arg8[%c0_6, %c0_7] : memref<8x128xf32, #tpu.memory_space<vmem>>, vector<8x128xf32>
    tpu.vector_store %arg8[%c0_6, %c0_7], %8 {strides = array<i32>} : memref<8x128xf32, #tpu.memory_space<vmem>>, vector<8x128xf32>,
    %c0_i32_8 = arith.constant 0 : i32
    %10 = arith.cmpi eq, %arg2, %c0_i32_8 : i32
    %11 = arith.extui %10 : i1 to i32
    %c0_i32_9 = arith.constant 0 : i32
    %12 = arith.cmpi ne, %11, %c0_i32_9 : i32
    scf.if %12 {
      %c0_10 = arith.constant 0 : index
      %c0_11 = arith.constant 0 : index
      %13 = vector.load %arg8[%c0_10, %c0_11] : memref<8x128xf32, #tpu.memory_space<vmem>>, vector<8x128xf32>
      %c0_12 = arith.constant 0 : index
      %c0_13 = arith.constant 0 : index
      %14 = vector.load %arg5[%c0_12, %c0_13] : memref<1x128xf32, #tpu.memory_space<vmem>>, vector<1x128xf32>
      %15 = vector.broadcast %14 : vector<1x128xf32> to vector<8x128xf32>
      %16 = arith.mulf %13, %15 : vector<8x128xf32>
      %c0_14 = arith.constant 0 : index
      %c0_15 = arith.constant 0 : index
      %17 = vector.load %arg6[%c0_14, %c0_15] : memref<1x128xf32, #tpu.memory_space<vmem>>, vector<1x128xf32>
      %18 = vector.broadcast %17 : vector<1x128xf32> to vector<8x128xf32>
      %19 = arith.addf %16, %18 : vector<8x128xf32>
      %c0_16 = arith.constant 0 : index
      %c0_17 = arith.constant 0 : index
      %20 = vector.load %arg7[%c0_16, %c0_17] : memref<8x128xf32, #tpu.memory_space<vmem>>, vector<8x128xf32>
      tpu.vector_store %arg7[%c0_16, %c0_17], %19 {strides = array<i32>} : memref<8x128xf32, #tpu.memory_space<vmem>>, vector<8x128xf32>,
    } else {
    }
    return
  }
  func.func @transform_0(%arg0: i32, %arg1: i32, %arg2: i32) -> (i32, i32) {
    %c0_i32 = arith.constant 0 : i32
    return %arg0, %arg2 : i32, i32
  }
  func.func @transform_1(%arg0: i32, %arg1: i32, %arg2: i32) -> (i32, i32) {
    %c0_i32 = arith.constant 0 : i32
    return %arg1, %arg2 : i32, i32
  }
  func.func @transform_2(%arg0: i32, %arg1: i32, %arg2: i32) -> (i32, i32) {
    %c0_i32 = arith.constant 0 : i32
    %c0_i32_0 = arith.constant 0 : i32
    return %c0_i32, %arg1 : i32, i32
  }
  func.func @transform_3(%arg0: i32, %arg1: i32, %arg2: i32) -> (i32, i32) {
    %c0_i32 = arith.constant 0 : i32
    %c0_i32_0 = arith.constant 0 : i32
    return %c0_i32, %arg1 : i32, i32
  }
  func.func @transform_4(%arg0: i32, %arg1: i32, %arg2: i32) -> (i32, i32) {
    %c0_i32 = arith.constant 0 : i32
    return %arg0, %arg1 : i32, i32
  }
}

</mosaic_0001>

<llo_original>
// kernel: _w8a32_call.1
$region0: #{_w8a32_call.1}
  #allocation0 [shape = 'u32[]', space=smem, size = 0x4, offset = 0x4, fixed_abs, tag = 'smem constant byte address 0x4 - core index']
  #allocation1 [shape = 'u32[144,128]{1,0:T(1,128)}', space=vmem, size = 0x12000, scoped, tag = 'internal scratch']
  #allocation2 [shape = 'f32[8,128]{1,0:T(8,128)}', space=vmem, size = 0x1000, scoped, tag = 'scratch operand']
  %s0 = inlined_call_operand.vmem [shape: f32[8,128], index: 0, kind: input, shape index: {}]
  %s1 = inlined_call_operand.vmem [shape: s8[128,128], index: 1, kind: input, shape index: {}]
  %s2 = inlined_call_operand.vmem [shape: f32[1,128], index: 2, kind: input, shape index: {}]
  %s3 = inlined_call_operand.vmem [shape: f32[1,128], index: 3, kind: input, shape index: {}]
  %s4 = inlined_call_operand.hbm [shape: f32[8,128], index: 4, kind: output, shape index: {}]
  %s5 = sld [smem:[#allocation0]]
  $region34: #{_w8a32_call.1} parent=0
    _
  %s7 = ssub.s32 1, %s5
  %s8 = scalar_select 0, %s7, %s5
  $region1: #{_w8a32_call.1} parent=0
    #allocation3 [shape = 'u8[4096]{0}', space=vmem, size = 0x1000, scoped, tag = 'output window, operand 0, single buffered']
    #allocation4 [shape = 's32[1]{0}', space=sflag, size = 0x4, scoped, tag = 'scoped memory for _w8a32_call.1']
    %9 = vsyncpa [#allocation4], 0
    // Predicated region
    $region2: #{_w8a32_call.1} parent=1 // pred_check
      _
    $region3: #{_w8a32_call.1} parent=1 // pred_check_branch
      %11 = sbr.rel (0) target = $region5
    $region4: #{_w8a32_call.1} parent=1 // pred_region
      _
    $region5: #{_w8a32_call.1} parent=1 // pred_fallthru
      _
    // Predicated region
    $region6: #{_w8a32_call.1} parent=1 // pred_check
      _
    $region7: #{_w8a32_call.1} parent=1 // pred_check_branch
      %13 = sbr.rel (0) target = $region9
    $region8: #{_w8a32_call.1} parent=1 // pred_region
      _
    $region9: #{_w8a32_call.1} parent=1 // pred_fallthru
      _
    // Predicated region
    $region10: #{_w8a32_call.1} parent=1 // pred_check
      _
    $region11: #{_w8a32_call.1} parent=1 // pred_check_branch
      %15 = sbr.rel (0) target = $region13
    $region12: #{_w8a32_call.1} parent=1 // pred_region
      _
    $region13: #{_w8a32_call.1} parent=1 // pred_fallthru
      _
    // Predicated region
    $region14: #{_w8a32_call.1} parent=1 // pred_check
      _
    $region15: #{_w8a32_call.1} parent=1 // pred_check_branch
      %17 = sbr.rel (0) target = $region17
    $region16: #{_w8a32_call.1} parent=1 // pred_region
      _
    $region17: #{_w8a32_call.1} parent=1 // pred_fallthru
      _
    %p18 = scmp.eq.s32.totalorder 0, 0
    // Predicated region
    $region18: #{_w8a32_call.1} parent=1 // pred_check
      %p19 = pneg %p18
    $region19: #{_w8a32_call.1} parent=1 // pred_check_branch
      %21 = sbr.rel (%p19) target = $region21
    $region20: #{_w8a32_call.1} parent=1 // pred_region
      %22 = vst [vmem:[#allocation2] sm:$0xff] 0.0
    $region21: #{_w8a32_call.1} parent=1 // pred_fallthru
      _
    %v23 = vld [vmem:[%s1] sm:$0xff]
    %v24 = vld [vmem:[%s1 + $0x8] sm:$0xff]
    %v25 = vld [vmem:[%s1 + $0x10] sm:$0xff]
    %v26 = vld [vmem:[%s1 + $0x18] sm:$0xff]
    %v27 = vunpack.c.0.s8 %v23
    %v28 = vunpack.c.1.s8 %v23
    %v29 = vunpack.c.2.s8 %v23
    %v30 = vunpack.c.3.s8 %v23
    %v31 = vunpack.c.0.s8 %v24
    %v32 = vunpack.c.1.s8 %v24
    %v33 = vunpack.c.2.s8 %v24
    %v34 = vunpack.c.3.s8 %v24
    %v35 = vunpack.c.0.s8 %v25
    %v36 = vunpack.c.1.s8 %v25
    %v37 = vunpack.c.2.s8 %v25
    %v38 = vunpack.c.3.s8 %v25
    %v39 = vunpack.c.0.s8 %v26
    %v40 = vunpack.c.1.s8 %v26
    %v41 = vunpack.c.2.s8 %v26
    %v42 = vunpack.c.3.s8 %v26
    %v43 = vcvt.s32.f32 %v27
    %v44 = vcvt.s32.f32 %v28
    %v45 = vcvt.s32.f32 %v29
    %v46 = vcvt.s32.f32 %v30
    %v47 = vcvt.s32.f32 %v31
    %v48 = vcvt.s32.f32 %v32
    %v49 = vcvt.s32.f32 %v33
    %v50 = vcvt.s32.f32 %v34
    %v51 = vcvt.s32.f32 %v35
    %v52 = vcvt.s32.f32 %v36
    %v53 = vcvt.s32.f32 %v37
    %v54 = vcvt.s32.f32 %v38
    %v55 = vcvt.s32.f32 %v39
    %v56 = vcvt.s32.f32 %v40
    %v57 = vcvt.s32.f32 %v41
    %v58 = vcvt.s32.f32 %v42
    %v59 = vld [vmem:[#allocation2] sm:$0xff]
    %v60 = vld [vmem:[%s0] sm:$0xff]
    %61 = vmatprep.subr.mxu0 0.0
    %62 = vmatpush1.xpose.msra.mxu0 %v43
    %63 = vmatprep.subr.mxu0 0.0
    %64 = vmatpush1.xpose.msra.mxu0 %v44
    %65 = vmatprep.subr.mxu0 0.0
    %66 = vmatpush1.xpose.msra.mxu0 %v45
    %67 = vmatprep.subr.mxu0 0.0
    %68 = vmatpush1.xpose.msra.mxu0 %v46
    %69 = vmatprep.subr.mxu0 0.0
    %70 = vmatpush1.xpose.msra.mxu0 %v47
    %71 = vmatprep.subr.mxu0 0.0
    %72 = vmatpush1.xpose.msra.mxu0 %v48
    %73 = vmatprep.subr.mxu0 0.0
    %74 = vmatpush1.xpose.msra.mxu0 %v49
    %75 = vmatprep.subr.mxu0 0.0
    %76 = vmatpush1.xpose.msra.mxu0 %v50
    %77 = vmatprep.subr.mxu0 0.0
    %78 = vmatpush1.xpose.msra.mxu0 %v51
    %79 = vmatprep.subr.mxu0 0.0
    %80 = vmatpush1.xpose.msra.mxu0 %v52
    %81 = vmatprep.subr.mxu0 0.0
    %82 = vmatpush1.xpose.msra.mxu0 %v53
    %83 = vmatprep.subr.mxu0 0.0
    %84 = vmatpush1.xpose.msra.mxu0 %v54
    %85 = vmatprep.subr.mxu0 0.0
    %86 = vmatpush1.xpose.msra.mxu0 %v55
    %87 = vmatprep.subr.mxu0 0.0
    %88 = vmatpush1.xpose.msra.mxu0 %v56
    %89 = vmatprep.subr.mxu0 0.0
    %90 = vmatpush1.xpose.msra.mxu0 %v57
    %91 = vmatprep.subr.mxu0 0.0
    %92 = vmatpush1.xpose.msra.mxu0 %v58
    %93 = vmatprep.subr.mxu0 0.0
    %94 = vmatpush1.xpose.msra.mxu0 0.0
    %95 = vmatprep.subr.mxu0 0.0
    %96 = vmatpush1.xpose.msra.mxu0 0.0
    %97 = vmatprep.subr.mxu0 0.0
    %98 = vmatpush1.xpose.msra.mxu0 0.0
    %99 = vmatprep.subr.mxu0 0.0
    %100 = vmatpush1.xpose.msra.mxu0 0.0
    %101 = vmatprep.subr.mxu0 0.0
    %102 = vmatpush1.xpose.msra.mxu0 0.0
    %103 = vmatprep.subr.mxu0 0.0
    %104 = vmatpush1.xpose.msra.mxu0 0.0
    %105 = vmatprep.subr.mxu0 0.0
    %106 = vmatpush1.xpose.msra.mxu0 0.0
    %107 = vmatprep.subr.mxu0 0.0
    %108 = vmatpush1.xpose.msra.mxu0 0.0
    %109 = vmatprep.subr.mxu0 0.0
    %110 = vmatpush1.xpose.msra.mxu0 0.0
    %111 = vmatprep.subr.mxu0 0.0
    %112 = vmatpush1.xpose.msra.mxu0 0.0
    %113 = vmatprep.subr.mxu0 0.0
    %114 = vmatpush1.xpose.msra.mxu0 0.0
    %115 = vmatprep.subr.mxu0 0.0
    %116 = vmatpush1.xpose.msra.mxu0 0.0
    %117 = vmatprep.subr.mxu0 0.0
    %118 = vmatpush1.xpose.msra.mxu0 0.0
    %119 = vmatprep.subr.mxu0 0.0
    %120 = vmatpush1.xpose.msra.mxu0 0.0
    %121 = vmatprep.subr.mxu0 0.0
    %122 = vmatpush1.xpose.msra.mxu0 0.0
    %123 = vmatprep.subr.mxu0 0.0
    %124 = vmatpush1.xpose.msra.mxu0 0.0
    %125 = vmatprep.mubr.f32.mxu0 0.0
    %126 = vmatmul.mubr.f32.gmra.mrb[0].mxu0 %v60
    %v127 = vpop.f32.mrb[0].mxu0
    %v128 = vadd.f32 0.0, %v127
    %v129 = vpop.f32.mrb[0].mxu0
    %130 = vdwg.mxu0
    %v131 = vadd.f32 %v59, %v128
    %132 = vst [vmem:[#allocation2] sm:$0xff] %v131
    // Predicated region
    $region22: #{_w8a32_call.1} parent=1 // pred_check
      %p133 = pneg %p18
    $region23: #{_w8a32_call.1} parent=1 // pred_check_branch
      %135 = sbr.rel (%p133) target = $region25
    $region24: #{_w8a32_call.1} parent=1 // pred_region
      %v136 = vld [vmem:[#allocation2] sm:$0xff]
      %v137 = vld [vmem:[%s2] sm:$0x1]
      %v139 = vlaneseq
      %v140 = vshrl.u32 %v139, 7
      %v141 = vsub.s32 0, %v140
      %v142 = vrot.slane %v137, %v141
      %v144 = vmul.f32 %v136, %v142
      %v145 = vld [vmem:[%s3] sm:$0x1]
      %v147 = vlaneseq
      %v148 = vshrl.u32 %v147, 7
      %v149 = vsub.s32 0, %v148
      %v150 = vrot.slane %v145, %v149
      %v152 = vadd.f32 %v144, %v150
      %153 = vst [vmem:[#allocation3] sm:$0xff] %v152
    $region25: #{_w8a32_call.1} parent=1 // pred_fallthru
      _
    // Predicated region
    $region26: #{_w8a32_call.1} parent=1 // pred_check
      _
    $region27: #{_w8a32_call.1} parent=1 // pred_check_branch
      %155 = sbr.rel (0) target = $region29
    $region28: #{_w8a32_call.1} parent=1 // pred_region
      %s157 = ssub.s32 128, 128
      %158 = vsyncadd [#allocation4], %s157
      %s160 = sshll.u32 [#allocation3], 4
      %s161 = int_to_ptr.vmem [resolvable:$true] %s160
      %163 = dma.vmem_to_hbm [thread:$0]  %s161, 128, %s4, [#allocation4]
    $region29: #{_w8a32_call.1} parent=1 // pred_fallthru
      _
    // Predicated region
    $region30: #{_w8a32_call.1} parent=1 // pred_check
      _
    $region31: #{_w8a32_call.1} parent=1 // pred_check_branch
      %165 = sbr.rel (0) target = $region33
    $region32: #{_w8a32_call.1} parent=1 // pred_region
      %166 = dma.done [#allocation4], 128
    $region33: #{_w8a32_call.1} parent=1 // pred_fallthru
      _
    %167 = vsyncpa [#allocation4], 1

</llo_original>
